<compile_context>
chip_gen: v7x
topology: tpu7x:2x2x1
jax: 0.10.0
libtpu: 0.0.40
codegen_flags: <defaults>
</compile_context>

<pallas_src>
import math
import functools

import jax
import jax.numpy as jnp
from jax import lax
from jax.experimental import pallas as pl
from jax.experimental.pallas import tpu as pltpu

_SQRT2_INV = 1.0 / math.sqrt(2.0)
_LN_EPS = 1e-5


def _default_vmem_limit():
    cap = 64 * 1024 * 1024
    try:
        info = pltpu.get_tpu_info()
        cap = int(getattr(info, "vmem_capacity_bytes", cap))
    except Exception:
        pass
    # ~75% of physical VMEM: 96 MiB on 128 MiB chips (v5e/v6e), 48 MiB on v7x.
    return max(32 * 1024 * 1024, min(cap * 3 // 4, 112 * 1024 * 1024))


_VMEM_LIMIT = _default_vmem_limit()
_RESIDENT_W_BYTES = _VMEM_LIMIT // 3   # budget for VMEM-resident weights


def _cparams(semantics):
    return pltpu.CompilerParams(dimension_semantics=semantics,
                                vmem_limit_bytes=_VMEM_LIMIT)


def _round_up(x, m):
    return ((x + m - 1) // m) * m


def _row_tile_and_pad(M):
    """Row tile (multiple of 8) and padded row count; waste bounded to ~12.5%."""
    if M <= 128:
        tm = max(8, _round_up(M, 8))
        return tm, tm
    for cand in (512, 256, 128):
        Mp = _round_up(M, cand)
        if (Mp - M) * 8 <= Mp:      # padding waste <= 12.5%
            return cand, Mp
    return 128, _round_up(M, 128)


def _col_tile(N, candidates=(1024, 512, 256, 128)):
    for c in candidates:
        if N % c == 0:
            return c
    return N


def _pad_rows(x, Mp):
    M = x.shape[0]
    if Mp == M:
        return x
    return jnp.pad(x, ((0, Mp - M), (0, 0)))


def _gelu(y):
    # torch.nn.GELU() default is the exact (erf) formulation.
    return 0.5 * y * (1.0 + lax.erf(y * _SQRT2_INV))


# ----------------------------- fused linear -----------------------------
# y = (LN(x) if ln else x) @ w + b ; optional GELU ; optional + residual.
# Default path: grid over row tiles only; the weight BlockSpec has a constant
# index_map so it is DMA'd into VMEM once and reused for every row tile.
# Fallback path (weight too big for residency): grid (N_tiles, M_tiles) with
# the weight-varying axis outermost so each weight stripe is fetched once.

def _linear_fused_kernel(x_ref, *refs, ln, activation, residual, eps):
    idx = 0
    x = x_ref[...].astype(jnp.float32)
    if ln:
        g_ref, bb_ref = refs[idx], refs[idx + 1]
        idx += 2
        mean = jnp.mean(x, axis=-1, keepdims=True)
        xc = x - mean
        var = jnp.mean(xc * xc, axis=-1, keepdims=True)
        x = (xc * lax.rsqrt(var + eps) * g_ref[...].astype(jnp.float32)
             + bb_ref[...].astype(jnp.float32))
    w_ref, b_ref = refs[idx], refs[idx + 1]
    idx += 2
    y = jnp.dot(x.astype(jnp.bfloat16), w_ref[...].astype(jnp.bfloat16),
                preferred_element_type=jnp.float32)
    y = y + b_ref[...].astype(jnp.float32)
    if activation == "gelu":
        y = _gelu(y)
    if residual:
        r_ref = refs[idx]
        idx += 1
        y = y + r_ref[...].astype(jnp.float32)
    out_ref = refs[idx]
    out_ref[...] = y.astype(out_ref.dtype)


def linear_fused(x, w, b, *, gamma=None, beta=None, activation=None, residual=None):
    M, K = x.shape
    K2, N = w.shape
    assert K == K2
    tm, Mp = _row_tile_and_pad(M)
    xp = _pad_rows(x, Mp)
    resp = _pad_rows(residual, Mp) if residual is not None else None

    kernel = functools.partial(
        _linear_fused_kernel, ln=gamma is not None, activation=activation,
        residual=residual is not None, eps=_LN_EPS)

    w_bytes = w.size * 4
    if w_bytes <= _RESIDENT_W_BYTES:
        # Weight resident in VMEM; grid only over row tiles.
        grid = (Mp // tm,)
        in_specs = [pl.BlockSpec((tm, K), lambda i: (i, 0))]
        args = [xp]
        if gamma is not None:
            in_specs += [pl.BlockSpec((1, K), lambda i: (0, 0)),
                         pl.BlockSpec((1, K), lambda i: (0, 0))]
            args += [gamma.reshape(1, K), beta.reshape(1, K)]
        in_specs += [pl.BlockSpec((K, N), lambda i: (0, 0)),
                     pl.BlockSpec((1, N), lambda i: (0, 0))]
        args += [w, b.reshape(1, N)]
        if residual is not None:
            in_specs.append(pl.BlockSpec((tm, N), lambda i: (i, 0)))
            args.append(resp)
        out_specs = pl.BlockSpec((tm, N), lambda i: (i, 0))
        semantics = ("parallel",)
    else:
        # Column-tiled; weight-varying axis outermost so each stripe loads once.
        tn = _col_tile(N)
        grid = (N // tn, Mp // tm)
        in_specs = [pl.BlockSpec((tm, K), lambda j, i: (i, 0))]
        args = [xp]
        if gamma is not None:
            in_specs += [pl.BlockSpec((1, K), lambda j, i: (0, 0)),
                         pl.BlockSpec((1, K), lambda j, i: (0, 0))]
            args += [gamma.reshape(1, K), beta.reshape(1, K)]
        in_specs += [pl.BlockSpec((K, tn), lambda j, i: (0, j)),
                     pl.BlockSpec((1, tn), lambda j, i: (0, j))]
        args += [w, b.reshape(1, N)]
        if residual is not None:
            in_specs.append(pl.BlockSpec((tm, tn), lambda j, i: (i, j)))
            args.append(resp)
        out_specs = pl.BlockSpec((tm, tn), lambda j, i: (i, j))
        semantics = ("parallel", "parallel")

    out = pl.pallas_call(
        kernel,
        grid=grid,
        in_specs=in_specs,
        out_specs=out_specs,
        out_shape=jax.ShapeDtypeStruct((Mp, N), x.dtype),
        compiler_params=_cparams(semantics),
    )(*args)
    return out[:M]


# ----------------------------- row-tiled LayerNorm -----------------------------

def _layernorm_kernel(x_ref, g_ref, b_ref, o_ref, *, eps):
    x = x_ref[...].astype(jnp.float32)
    mean = jnp.mean(x, axis=-1, keepdims=True)
    xc = x - mean
    var = jnp.mean(xc * xc, axis=-1, keepdims=True)
    y = xc * lax.rsqrt(var + eps) * g_ref[...].astype(jnp.float32) \
        + b_ref[...].astype(jnp.float32)
    o_ref[...] = y.astype(o_ref.dtype)


def layernorm(x, g, b, eps=_LN_EPS):
    orig_shape = x.shape
    D = orig_shape[-1]
    x2 = x.reshape(-1, D)
    M = x2.shape[0]
    tm, Mp = _row_tile_and_pad(M)
    xp = _pad_rows(x2, Mp)
    y = pl.pallas_call(
        functools.partial(_layernorm_kernel, eps=eps),
        grid=(Mp // tm,),
        in_specs=[pl.BlockSpec((tm, D), lambda i: (i, 0)),
                  pl.BlockSpec((1, D), lambda i: (0, 0)),
                  pl.BlockSpec((1, D), lambda i: (0, 0))],
        out_specs=pl.BlockSpec((tm, D), lambda i: (i, 0)),
        out_shape=jax.ShapeDtypeStruct((Mp, D), x.dtype),
        compiler_params=_cparams(("parallel",)),
    )(xp, g.reshape(1, D), b.reshape(1, D))
    return y[:M].reshape(orig_shape)


# ----------------------------- fused MLP block -----------------------------
# out = x + GELU(LN(x) @ fc_w + fc_b) @ proj_w + proj_b
# Resident path (default for W <= ~512): both weights live in VMEM with
# constant index_maps; grid over row tiles only; the [tm, 4W] GELU intermediate
# never touches HBM. Reduction path (very wide models): 4W axis is an
# "arbitrary" grid axis with an f32 VMEM accumulator and pl.when init/finalize.

def _fused_mlp_resident_kernel(x_ref, g_ref, b_ref, fcw_ref, fcb_ref, pw_ref,
                               pb_ref, out_ref, *, eps):
    x = x_ref[...].astype(jnp.float32)
    mean = jnp.mean(x, axis=-1, keepdims=True)
    xc = x - mean
    var = jnp.mean(xc * xc, axis=-1, keepdims=True)
    xn = (xc * lax.rsqrt(var + eps) * g_ref[...].astype(jnp.float32)
          + b_ref[...].astype(jnp.float32))
    h = jnp.dot(xn.astype(jnp.bfloat16), fcw_ref[...].astype(jnp.bfloat16),
                preferred_element_type=jnp.float32)
    h = _gelu(h + fcb_ref[...].astype(jnp.float32))
    y = jnp.dot(h.astype(jnp.bfloat16), pw_ref[...].astype(jnp.bfloat16),
                preferred_element_type=jnp.float32)
    y = y + pb_ref[...].astype(jnp.float32) + x            # fused residual
    out_ref[...] = y.astype(out_ref.dtype)


def _fused_mlp_reduce_kernel(x_ref, g_ref, b_ref, fcw_ref, fcb_ref, pw_ref,
                             pb_ref, out_ref, acc_ref, xn_ref, *, eps):
    j = pl.program_id(1)

    @pl.when(j == 0)
    def _():
        x = x_ref[...].astype(jnp.float32)
        mean = jnp.mean(x, axis=-1, keepdims=True)
        xc = x - mean
        var = jnp.mean(xc * xc, axis=-1, keepdims=True)
        xn = (xc * lax.rsqrt(var + eps) * g_ref[...].astype(jnp.float32)
              + b_ref[...].astype(jnp.float32))
        xn_ref[...] = xn.astype(xn_ref.dtype)
        acc_ref[...] = jnp.zeros_like(acc_ref)

    h = jnp.dot(xn_ref[...], fcw_ref[...].astype(jnp.bfloat16),
                preferred_element_type=jnp.float32)
    h = _gelu(h + fcb_ref[...].astype(jnp.float32))
    acc_ref[...] += jnp.dot(h.astype(jnp.bfloat16),
                            pw_ref[...].astype(jnp.bfloat16),
                            preferred_element_type=jnp.float32)

    @pl.when(j == pl.num_programs(1) - 1)
    def _():
        y = (acc_ref[...] + pb_ref[...].astype(jnp.float32)
             + x_ref[...].astype(jnp.float32))              # fused residual
        out_ref[...] = y.astype(out_ref.dtype)


def fused_mlp_block(x, g, b, fc_w, fc_b, proj_w, proj_b):
    M, W = x.shape
    H4 = fc_w.shape[1]
    tm, Mp = _row_tile_and_pad(M)
    xp = _pad_rows(x, Mp)
    w_bytes = (fc_w.size + proj_w.size) * 4

    if w_bytes <= _RESIDENT_W_BYTES:
        out = pl.pallas_call(
            functools.partial(_fused_mlp_resident_kernel, eps=_LN_EPS),
            grid=(Mp // tm,),
            in_specs=[pl.BlockSpec((tm, W), lambda i: (i, 0)),
                      pl.BlockSpec((1, W), lambda i: (0, 0)),
                      pl.BlockSpec((1, W), lambda i: (0, 0)),
                      pl.BlockSpec((W, H4), lambda i: (0, 0)),
                      pl.BlockSpec((1, H4), lambda i: (0, 0)),
                      pl.BlockSpec((H4, W), lambda i: (0, 0)),
                      pl.BlockSpec((1, W), lambda i: (0, 0))],
            out_specs=pl.BlockSpec((tm, W), lambda i: (i, 0)),
            out_shape=jax.ShapeDtypeStruct((Mp, W), x.dtype),
            compiler_params=_cparams(("parallel",)),
        )(xp, g.reshape(1, W), b.reshape(1, W), fc_w, fc_b.reshape(1, H4),
          proj_w, proj_b.reshape(1, W))
    else:
        # TODO(synk): consider pipeline_mode=pl.Buffered(3) on the streamed
        # weight specs if DMA is exposed behind the two back-to-back dots.
        tn4 = _col_tile(H4)
        grid = (Mp // tm, H4 // tn4)
        out = pl.pallas_call(
            functools.partial(_fused_mlp_reduce_kernel, eps=_LN_EPS),
            grid=grid,
            in_specs=[pl.BlockSpec((tm, W), lambda i, j: (i, 0)),
                      pl.BlockSpec((1, W), lambda i, j: (0, 0)),
                      pl.BlockSpec((1, W), lambda i, j: (0, 0)),
                      pl.BlockSpec((W, tn4), lambda i, j: (0, j)),
                      pl.BlockSpec((1, tn4), lambda i, j: (0, j)),
                      pl.BlockSpec((tn4, W), lambda i, j: (j, 0)),
                      pl.BlockSpec((1, W), lambda i, j: (0, 0))],
            out_specs=pl.BlockSpec((tm, W), lambda i, j: (i, 0)),
            out_shape=jax.ShapeDtypeStruct((Mp, W), x.dtype),
            scratch_shapes=[pltpu.VMEM((tm, W), jnp.float32),    # accumulator
                            pltpu.VMEM((tm, W), jnp.bfloat16)],  # cached LN(x)
            compiler_params=_cparams(("parallel", "arbitrary")),
        )(xp, g.reshape(1, W), b.reshape(1, W), fc_w, fc_b.reshape(1, H4),
          proj_w, proj_b.reshape(1, W))
    return out[:M]


# ----------------------------- attention -----------------------------
# Grid = (B, heads). The wrapper reshapes/permutes the QKV activation once to
# [B, H, T, 3*d] (head-separated, lane-aligned per grid step); the kernel then
# works on exactly one (batch, head) slab — the BlockSpec DMAs only the data
# that head needs, there is no unrolled Python head loop, and the megacore gets
# B*H parallel steps. The two 1/sqrt(sqrt(d)) scales are folded into q once and
# the softmax divide uses pl.reciprocal(approx=True) (EUP slot).

def _attn_kernel(qkv_ref, o_ref, *, head_dim, scale):
    T = qkv_ref.shape[2]
    qkv = qkv_ref[...].reshape(T, 3 * head_dim)
    d = head_dim
    q = qkv[:, :d].astype(jnp.float32) * (scale * scale)     # == 1/sqrt(d)
    k = qkv[:, d:2 * d]
    v = qkv[:, 2 * d:3 * d]
    s = lax.dot_general(q.astype(jnp.bfloat16), k.astype(jnp.bfloat16),
                        (((1,), (1,)), ((), ())),
                        preferred_element_type=jnp.float32)  # [T, T]
    s = s - jnp.max(s, axis=-1, keepdims=True)
    p = jnp.exp(s)
    p = p * pl.reciprocal(jnp.sum(p, axis=-1, keepdims=True), approx=True)
    o = jnp.dot(p.astype(jnp.bfloat16), v.astype(jnp.bfloat16),
                preferred_element_type=jnp.float32)          # [T, d]
    o_ref[...] = o.reshape(o_ref.shape).astype(o_ref.dtype)


def attention(qkv, heads, head_dim, scale):
    # TODO(synk): for very long point clouds (T >> 2048) switch to a KV-tiled
    # online-softmax (flash) grid so the T x T score tile never materializes.
    B, T, W3 = qkv.shape
    d3 = 3 * head_dim
    # torch layout: per head [q(d)|k(d)|v(d)] -> head-separated [B, H, T, 3d].
    qkv4 = qkv.reshape(B, T, heads, d3).transpose(0, 2, 1, 3)
    out = pl.pallas_call(
        functools.partial(_attn_kernel, head_dim=head_dim, scale=scale),
        grid=(B, heads),
        in_specs=[pl.BlockSpec((1, 1, T, d3), lambda b, h: (b, h, 0, 0))],
        out_specs=pl.BlockSpec((1, 1, T, head_dim), lambda b, h: (b, h, 0, 0)),
        out_shape=jax.ShapeDtypeStruct((B, heads, T, head_dim), qkv.dtype),
        compiler_params=_cparams(("parallel", "parallel")),
    )(qkv4)
    return out.transpose(0, 2, 1, 3).reshape(B, T, heads * head_dim)


# ----------------------------- model (glue) -----------------------------

def timestep_embedding(ts, dim, max_period=10000):
    half = dim // 2
    freqs = jnp.exp(
        -math.log(max_period) * jnp.arange(half, dtype=jnp.float32) / half)
    args = ts.astype(jnp.float32)[:, None] * freqs[None]
    emb = jnp.concatenate([jnp.cos(args), jnp.sin(args)], axis=-1)
    if dim % 2:
        emb = jnp.concatenate([emb, jnp.zeros_like(emb[:, :1])], axis=-1)
    return emb


def resblock(h2d, B, T, p, heads):
    W = h2d.shape[1]
    attn_ch = W // heads
    scale = 1.0 / math.sqrt(math.sqrt(attn_ch))

    # attention branch: LN1 fused into the QKV matmul; residual fused into proj.
    qkv = linear_fused(h2d, p["qkv_w"], p["qkv_b"],
                       gamma=p["ln1_g"], beta=p["ln1_b"])          # [B*T, 3W]
    a = attention(qkv.reshape(B, T, 3 * W), heads, attn_ch, scale) # [B, T, W]
    h2d = linear_fused(a.reshape(B * T, W), p["attn_proj_w"], p["attn_proj_b"],
                       residual=h2d)                               # h + attn

    # MLP branch: LN2 + fc + GELU + proj + residual all in one kernel.
    h2d = fused_mlp_block(h2d, p["ln2_g"], p["ln2_b"],
                          p["fc_w"], p["fc_b"], p["mlp_proj_w"], p["mlp_proj_b"])
    return h2d


def point_diffusion_transformer(params, x, ts, cls, *, heads,
                                num_classes=1, time_token_cond=False):
    """x: [B, C, N], ts: [B] float, cls: [B] int -> [B, C_out, N]."""
    B, C, N = x.shape
    W = params["in_w"].shape[1]
    assert W % heads == 0

    # Tiny ops stay in XLA (perf review): B-row time-embed MLP, K=3 input proj,
    # N=3 output proj would hit masked-store / MXU-utilisation floors in Pallas.
    temb = timestep_embedding(ts, W)
    temb = _gelu(jnp.dot(temb, params["time_fc_w"]) + params["time_fc_b"])
    temb = jnp.dot(temb, params["time_proj_w"]) + params["time_proj_b"]
    if num_classes > 1:
        temb = temb + params["class_embed"][cls.astype(jnp.int32)]

    h = jnp.einsum("bcn,cw->bnw", x, params["in_w"]) + params["in_b"]  # [B,N,W]

    if time_token_cond:
        h = jnp.concatenate([temb[:, None, :], h], axis=1)
    else:
        h = h + temb[:, None, :]
    T = h.shape[1]

    h2d = layernorm(h.reshape(B * T, W), params["ln_pre_g"], params["ln_pre_b"])
    for blk in params["blocks"]:
        h2d = resblock(h2d, B, T, blk, heads)
    h2d = layernorm(h2d, params["ln_post_g"], params["ln_post_b"])

    h = h2d.reshape(B, T, W)
    if time_token_cond:
        h = h[:, 1:]

    out = jnp.dot(h, params["out_w"]) + params["out_b"]     # [B, T_out, C_out]
    return jnp.transpose(out, (0, 2, 1))


# ----------------------------- parameter init -----------------------------

def init_params(key, *, input_channels, output_channels, width, layers,
                init_scale=0.25, num_classes=1):
    keys = list(jax.random.split(key, 8 + 8 * len(layers)))
    kit = iter(keys)

    def normal(shape, std):
        return std * jax.random.normal(next(kit), shape, dtype=jnp.float32)

    te_std = init_scale * math.sqrt(1.0 / width)
    params = {
        "time_fc_w": normal((width, 4 * width), te_std),
        "time_fc_b": jnp.zeros((4 * width,), jnp.float32),
        "time_proj_w": normal((4 * width, width), te_std),
        "time_proj_b": jnp.zeros((width,), jnp.float32),
        "in_w": normal((input_channels, width), 0.02),
        "in_b": jnp.zeros((width,), jnp.float32),
        # output_proj is zero-initialized in the torch module.
        "out_w": jnp.zeros((width, output_channels), jnp.float32),
        "out_b": jnp.zeros((output_channels,), jnp.float32),
        "ln_pre_g": jnp.ones((width,), jnp.float32),
        "ln_pre_b": jnp.zeros((width,), jnp.float32),
        "ln_post_g": jnp.ones((width,), jnp.float32),
        "ln_post_b": jnp.zeros((width,), jnp.float32),
        "class_embed": normal((num_classes, width), 0.02),
    }
    blocks = []
    for w in layers:
        s = init_scale * math.sqrt(1.0 / w)
        blocks.append({
            "ln1_g": jnp.ones((w,), jnp.float32),
            "ln1_b": jnp.zeros((w,), jnp.float32),
            "qkv_w": normal((w, 3 * w), s),
            "qkv_b": jnp.zeros((3 * w,), jnp.float32),
            "attn_proj_w": normal((w, w), s),
            "attn_proj_b": jnp.zeros((w,), jnp.float32),
            "ln2_g": jnp.ones((w,), jnp.float32),
            "ln2_b": jnp.zeros((w,), jnp.float32),
            "fc_w": normal((w, 4 * w), s),
            "fc_b": jnp.zeros((4 * w,), jnp.float32),
            "mlp_proj_w": normal((4 * w, w), s),
            "mlp_proj_b": jnp.zeros((w,), jnp.float32),
        })
    params["blocks"] = blocks
    return params


# ----------------------------- main -----------------------------

if __name__ == "__main__":
    B = 2
    C_IN = 3
    C_OUT = 3
    N_PTS = 8          # number of points (sequence length)
    WIDTH = 32
    HEADS = 4
    LAYERS = (32, 32)  # two residual attention blocks of width 32
    INIT_SCALE = 0.25

    key = jax.random.PRNGKey(0)
    k_param, k_x, k_t = jax.random.split(key, 3)

    params = init_params(
        k_param,
        input_channels=C_IN,
        output_channels=C_OUT,
        width=WIDTH,
        layers=LAYERS,
        init_scale=INIT_SCALE,
        num_classes=1,
    )

    x = jax.random.normal(k_x, (B, C_IN, N_PTS), dtype=jnp.float32)  # [B, C, N]
    ts = jax.random.uniform(k_t, (B,), dtype=jnp.float32) * 1000.0   # [B]
    cls = jnp.zeros((B,), dtype=jnp.int32)                           # [B]

    out = point_diffusion_transformer(
        params, x, ts, cls, heads=HEADS, num_classes=1, time_token_cond=False)
    out = jax.block_until_ready(out)

    assert out.shape == (B, C_OUT, N_PTS), out.shape
    assert bool(jnp.all(jnp.isfinite(out)))
    print("KERNEL_OK")
</pallas_src>

<mosaic_0001>
module attributes {stable_mosaic.version = 11 : i64} {
  func.func @_layernorm_kernel(%arg0: i32, %arg1: memref<16x32xf32, #tpu.memory_space<vmem>>, %arg2: memref<1x32xf32, #tpu.memory_space<vmem>>, %arg3: memref<1x32xf32, #tpu.memory_space<vmem>>, %arg4: memref<16x32xf32, #tpu.memory_space<vmem>>) attributes {dimension_semantics = [#tpu.dimension_semantics<parallel>], iteration_bounds = array<i64: 1>, scalar_prefetch = 0 : i64, scratch_operands = 0 : i64, tpu.core_type = #tpu.core_type<tc>, window_params = [{transform_indices = @transform_0, window_bounds = array<i64: 16, 32>}, {pipeline_mode = #tpu.pipeline_mode<synchronous>, transform_indices = @transform_1, window_bounds = array<i64: 1, 32>}, {pipeline_mode = #tpu.pipeline_mode<synchronous>, transform_indices = @transform_2, window_bounds = array<i64: 1, 32>}, {transform_indices = @transform_3, window_bounds = array<i64: 16, 32>}]} {
    %c0 = arith.constant 0 : index
    %c0_0 = arith.constant 0 : index
    %0 = vector.load %arg1[%c0, %c0_0] : memref<16x32xf32, #tpu.memory_space<vmem>>, vector<16x32xf32>
    %cst = arith.constant dense<0.000000e+00> : vector<16xf32>
    %1 = vector.multi_reduction <add>, %0, %cst [1] : vector<16x32xf32> to vector<16xf32>
    %2 = vector.shape_cast %1 : vector<16xf32> to vector<16x1xf32>
    %cst_1 = arith.constant 3.200000e+01 : f32
    %3 = vector.broadcast %cst_1 : f32 to vector<16x1xf32>
    %4 = arith.divf %2, %3 : vector<16x1xf32>
    %5 = vector.broadcast %4 : vector<16x1xf32> to vector<16x32xf32>
    %6 = arith.subf %0, %5 : vector<16x32xf32>
    %7 = arith.mulf %6, %6 : vector<16x32xf32>
    %cst_2 = arith.constant dense<0.000000e+00> : vector<16xf32>
    %8 = vector.multi_reduction <add>, %7, %cst_2 [1] : vector<16x32xf32> to vector<16xf32>
    %9 = vector.shape_cast %8 : vector<16xf32> to vector<16x1xf32>
    %cst_3 = arith.constant 3.200000e+01 : f32
    %10 = vector.broadcast %cst_3 : f32 to vector<16x1xf32>
    %11 = arith.divf %9, %10 : vector<16x1xf32>
    %cst_4 = arith.constant 9.99999974E-6 : f32
    %12 = vector.broadcast %cst_4 : f32 to vector<16x1xf32>
    %13 = arith.addf %11, %12 : vector<16x1xf32>
    %14 = math.rsqrt %13 : vector<16x1xf32>
    %15 = vector.broadcast %14 : vector<16x1xf32> to vector<16x32xf32>
    %16 = arith.mulf %6, %15 : vector<16x32xf32>
    %c0_5 = arith.constant 0 : index
    %c0_6 = arith.constant 0 : index
    %17 = vector.load %arg2[%c0_5, %c0_6] : memref<1x32xf32, #tpu.memory_space<vmem>>, vector<1x32xf32>
    %18 = vector.broadcast %17 : vector<1x32xf32> to vector<16x32xf32>
    %19 = arith.mulf %16, %18 : vector<16x32xf32>
    %c0_7 = arith.constant 0 : index
    %c0_8 = arith.constant 0 : index
    %20 = vector.load %arg3[%c0_7, %c0_8] : memref<1x32xf32, #tpu.memory_space<vmem>>, vector<1x32xf32>
    %21 = vector.broadcast %20 : vector<1x32xf32> to vector<16x32xf32>
    %22 = arith.addf %19, %21 : vector<16x32xf32>
    %c0_9 = arith.constant 0 : index
    %c0_10 = arith.constant 0 : index
    %23 = vector.load %arg4[%c0_9, %c0_10] : memref<16x32xf32, #tpu.memory_space<vmem>>, vector<16x32xf32>
    tpu.vector_store %arg4[%c0_9, %c0_10], %22 {strides = array<i32>} : memref<16x32xf32, #tpu.memory_space<vmem>>, vector<16x32xf32>,
    return
  }
  func.func @transform_0(%arg0: i32) -> (i32, i32) {
    %c0_i32 = arith.constant 0 : i32
    %c0_i32_0 = arith.constant 0 : i32
    return %arg0, %c0_i32 : i32, i32
  }
  func.func @transform_1(%arg0: i32) -> (i32, i32) {
    %c0_i32 = arith.constant 0 : i32
    %c0_i32_0 = arith.constant 0 : i32
    %c0_i32_1 = arith.constant 0 : i32
    return %c0_i32, %c0_i32_0 : i32, i32
  }
  func.func @transform_2(%arg0: i32) -> (i32, i32) {
    %c0_i32 = arith.constant 0 : i32
    %c0_i32_0 = arith.constant 0 : i32
    %c0_i32_1 = arith.constant 0 : i32
    return %c0_i32, %c0_i32_0 : i32, i32
  }
  func.func @transform_3(%arg0: i32) -> (i32, i32) {
    %c0_i32 = arith.constant 0 : i32
    %c0_i32_0 = arith.constant 0 : i32
    return %arg0, %c0_i32 : i32, i32
  }
}

</mosaic_0001>

<llo_original>
// kernel: tpu_custom_call.1
$region0: #{tpu_custom_call.1}
  #allocation0 [shape = 'u32[]', space=smem, size = 0x4, offset = 0x4, fixed_abs, tag = 'smem constant byte address 0x4 - core index']
  #allocation1 [shape = 'u32[144,128]{1,0:T(1,128)}', space=vmem, size = 0x12000, scoped, tag = 'internal scratch']
  %s0 = inlined_call_operand.hbm [shape: f32[16,32], index: 0, kind: input, shape index: {}]
  %s1 = inlined_call_operand.vmem [shape: f32[1,32], index: 1, kind: input, shape index: {}]
  %s2 = inlined_call_operand.vmem [shape: f32[1,32], index: 2, kind: input, shape index: {}]
  %s3 = inlined_call_operand.hbm [shape: f32[16,32], index: 3, kind: output, shape index: {}]
  %s4 = sld [smem:[#allocation0]]
  $region26: #{tpu_custom_call.1} parent=0
    _
  %s6 = ssub.s32 1, %s4
  %s7 = scalar_select 0, %s6, %s4
  $region1: #{tpu_custom_call.1} parent=0
    #allocation2 [shape = 'u8[8192]{0}', space=vmem, size = 0x2000, scoped, tag = 'input window, operand 0, single buffered']
    #allocation3 [shape = 's32[1]{0}', space=sflag, size = 0x4, scoped, tag = 'scoped memory for tpu_custom_call.1']
    #allocation4 [shape = 's32[1]{0}', space=sflag, size = 0x4, scoped, tag = 'scoped memory for tpu_custom_call.1']
    #allocation5 [shape = 'u8[8192]{0}', space=vmem, size = 0x2000, scoped, tag = 'output window, operand 0, single buffered']
    %8 = vsyncpa [#allocation3], 0
    %9 = vsyncpa [#allocation4], 0
    // Predicated region
    $region2: #{tpu_custom_call.1} parent=1 // pred_check
      _
    $region3: #{tpu_custom_call.1} parent=1 // pred_check_branch
      %11 = sbr.rel (0) target = $region5
    $region4: #{tpu_custom_call.1} parent=1 // pred_region
      %s13 = ssub.s32 256, 256
      %14 = vsyncadd [#allocation3], %s13
      %s15 = sshll.u32 [#allocation2], 4
      %s16 = int_to_ptr.vmem [resolvable:$true] %s15
      %21 = dma.hbm_to_vmem [thread:$0]  %s0, 256, %s16, [#allocation3], 128, 128, 8
    $region5: #{tpu_custom_call.1} parent=1 // pred_fallthru
      _
    // Predicated region
    $region6: #{tpu_custom_call.1} parent=1 // pred_check
      _
    $region7: #{tpu_custom_call.1} parent=1 // pred_check_branch
      %23 = sbr.rel (0) target = $region9
    $region8: #{tpu_custom_call.1} parent=1 // pred_region
      _
    $region9: #{tpu_custom_call.1} parent=1 // pred_fallthru
      _
    // Predicated region
    $region10: #{tpu_custom_call.1} parent=1 // pred_check
      _
    $region11: #{tpu_custom_call.1} parent=1 // pred_check_branch
      %25 = sbr.rel (0) target = $region13
    $region12: #{tpu_custom_call.1} parent=1 // pred_region
      _
    $region13: #{tpu_custom_call.1} parent=1 // pred_fallthru
      _
    // Predicated region
    $region14: #{tpu_custom_call.1} parent=1 // pred_check
      _
    $region15: #{tpu_custom_call.1} parent=1 // pred_check_branch
      %27 = sbr.rel (0) target = $region17
    $region16: #{tpu_custom_call.1} parent=1 // pred_region
      %28 = dma.done [#allocation3], 256
    $region17: #{tpu_custom_call.1} parent=1 // pred_fallthru
      _
    %v29 = vld [vmem:[#allocation2] sm:$0xff]
    %v30 = vld [vmem:[#allocation2 + $0x8] sm:$0xff]
    %vm31 = vcmask 261120
    %v32 = vsel %vm31, %v29, 0.0
    %33 = vadd.xlane.f32.xlu0 %v32
    %v34 = vpop.xlane.xlu0 %33
    %v35 = vsel %vm31, %v30, 0.0
    %36 = vadd.xlane.f32.xlu0 %v35
    %v37 = vpop.xlane.xlu0 %36
    %v38 = vrcp.pop 32.0
    %v39 = vmul.f32 %v34, %v38
    %v40 = vmul.f32 %v37, %v38
    %v41 = vsub.f32 %v29, %v39
    %v42 = vsub.f32 %v30, %v40
    %v43 = vmul.f32 %v41, %v41
    %v44 = vmul.f32 %v42, %v42
    %v45 = vsel %vm31, %v43, 0.0
    %46 = vadd.xlane.f32.xlu0 %v45
    %v47 = vpop.xlane.xlu0 %46
    %v48 = vsel %vm31, %v44, 0.0
    %49 = vadd.xlane.f32.xlu0 %v48
    %v50 = vpop.xlane.xlu0 %49
    %v51 = vmul.f32 %v47, %v38
    %v52 = vmul.f32 %v50, %v38
    %v53 = vadd.f32 %v51, 1e-05
    %v54 = vadd.f32 %v52, 1e-05
    %v55 = vrsqrt.pop %v53
    %v56 = vrsqrt.pop %v54
    %v57 = vmul.f32 %v41, %v55
    %v58 = vmul.f32 %v42, %v56
    %v59 = vld [vmem:[%s1] sm:$0x1]
    %v61 = vlaneseq
    %v62 = vshrl.u32 %v61, 7
    %v63 = vsub.s32 0, %v62
    %v64 = vrot.slane %v59, %v63
    %v66 = vmul.f32 %v57, %v64
    %v67 = vmul.f32 %v58, %v64
    %v68 = vld [vmem:[%s2] sm:$0x1]
    %v70 = vlaneseq
    %v71 = vshrl.u32 %v70, 7
    %v72 = vsub.s32 0, %v71
    %v73 = vrot.slane %v68, %v72
    %v75 = vadd.f32 %v66, %v73
    %v76 = vadd.f32 %v67, %v73
    %77 = vst.msk [vmem:[#allocation5] sm:$0xff] %vm31, %v75
    %78 = vst.msk [vmem:[#allocation5 + $0x8] sm:$0xff] %vm31, %v76
    // Predicated region
    $region18: #{tpu_custom_call.1} parent=1 // pred_check
      _
    $region19: #{tpu_custom_call.1} parent=1 // pred_check_branch
      %80 = sbr.rel (0) target = $region21
    $region20: #{tpu_custom_call.1} parent=1 // pred_region
      %s82 = ssub.s32 256, 256
      %83 = vsyncadd [#allocation4], %s82
      %s84 = sshll.u32 [#allocation5], 4
      %s85 = int_to_ptr.vmem [resolvable:$true] %s84
      %90 = dma.vmem_to_hbm [thread:$0]  %s85, 256, %s3, [#allocation4], 128, 128, 8
    $region21: #{tpu_custom_call.1} parent=1 // pred_fallthru
      _
    // Predicated region
    $region22: #{tpu_custom_call.1} parent=1 // pred_check
      _
    $region23: #{tpu_custom_call.1} parent=1 // pred_check_branch
      %92 = sbr.rel (0) target = $region25
    $region24: #{tpu_custom_call.1} parent=1 // pred_region
      %93 = dma.done [#allocation4], 256
    $region25: #{tpu_custom_call.1} parent=1 // pred_fallthru
      _
    %94 = vsyncpa [#allocation3], 1
    %95 = vsyncpa [#allocation4], 1

</llo_original>
